<compile_context>
chip_gen: v6e
topology: v6e:2x2x1
jax: 0.10.0
libtpu: 0.0.40
codegen_flags: <defaults>
</compile_context>

<pallas_src>
import math
import functools

import jax
import jax.numpy as jnp
from jax.experimental import pallas as pl
from jax.experimental.pallas import tpu as pltpu


_MIN_GRID_STEPS = 8  # keep v7x's 2 TensorCores and the DMA pipeline busy


def _shift_flat(x, s, L):
    """out[i] = x[(i + s) mod L]; wrapped (invalid) lanes are masked by the caller."""
    if L % 128 == 0:
        return pltpu.roll(x, (-s) % L, axis=1)   # XLU lane rotate (off the VALU slot)
    return jnp.roll(x, -s, axis=1)               # slice+concat fallback for odd widths


def _residual_convmixer_kernel(x_ref, p_ref, o_ref, *, H, W, K, pad, approx_gelu):
    # x_ref : (TC, H*W)     flattened-spatial input block (also the residual source)
    # p_ref : (TC, K*K+3)   packed per-channel params: [taps | bias | bn_scale | bn_offset]
    # o_ref : (TC, H*W)     output block (lane-dense minor dim)
    TC, L = x_ref.shape
    KK = K * K

    # Single block read (residual reuses it) and single hoisted param load.
    x = x_ref[...].astype(jnp.float32)
    p = p_ref[...]

    bias = p[:, KK:KK + 1]           # (TC, 1) per-sublane scalars, broadcast along lanes
    scale = p[:, KK + 1:KK + 2]
    offset = p[:, KK + 2:KK + 3]

    # Flattened-spatial (row, col) as exact integer-valued f32 (avoids vector int
    # div/mod, which Mosaic may not lower).  Computed once, reused by every tap mask.
    flat = jax.lax.broadcasted_iota(jnp.int32, (1, L), 1).astype(jnp.float32)
    row = jnp.floor((flat + 0.5) * (1.0 / W))
    col = flat - row * W

    # Depthwise 'same' conv (cross-correlation): K*K lane-rolls of the flattened image
    # plus border masks that zero sources falling outside the image.
    acc = jnp.zeros((TC, L), jnp.float32)
    for dh in range(K):
        oh = dh - pad
        for dw in range(K):
            ow = dw - pad
            tap = p[:, dh * K + dw:dh * K + dw + 1]          # (TC, 1)
            s = oh * W + ow                                   # flat source offset
            shifted = x if s == 0 else _shift_flat(x, s, L)
            conds = []
            if oh < 0:
                conds.append(row >= (-oh))
            elif oh > 0:
                conds.append(row < (H - oh))
            if ow < 0:
                conds.append(col >= (-ow))
            elif ow > 0:
                conds.append(col < (W - ow))
            if conds:
                m = functools.reduce(jnp.logical_and, conds)  # (1, L), broadcast over TC
                shifted = jnp.where(m, shifted, 0.0)
            acc = acc + tap * shifted
    acc = acc + bias

    # GELU: tanh form routes the transcendental through the otherwise-idle EUP slot;
    # erf form bit-matches PyTorch nn.GELU() default.
    if approx_gelu:
        c0 = math.sqrt(2.0 / math.pi)
        y = 0.5 * acc * (1.0 + jnp.tanh(c0 * (acc + 0.044715 * acc * acc * acc)))
    else:
        y = 0.5 * acc * (1.0 + jax.lax.erf(acc * (1.0 / math.sqrt(2.0))))

    # BatchNorm2d (inference) folded to per-channel scale/offset.
    y = y * scale + offset

    # Residual: fn(x) + x — reuse the already-loaded block (single HBM read of x).
    o_ref[...] = (y + x).astype(o_ref.dtype)


def _vmem_capacity_bytes():
    try:
        info = pltpu.get_tpu_info()
        cap = getattr(info, "vmem_capacity_bytes", None)
        if cap:
            return int(cap)
    except Exception:
        pass
    return 64 * 1024 * 1024   # conservative fallback: v7x per-TensorCore VMEM


def _pick_channel_block(C, N, L, in_itemsize, budget):
    """Largest channel tile whose per-step working set fits `budget`, constrained to
    keep the sublane block dim (8,*)-aligned and the grid long enough to pipeline."""
    cands = [d for d in range(1, C + 1) if C % d == 0 and (d % 8 == 0 or d == C)]

    def vmem_bytes(tc):
        io = 2 * 2 * tc * L * in_itemsize    # double-buffered in + out blocks (caller dtype)
        f32_tmp = 5 * tc * L * 4             # x_f32 / shifted / masked / acc / y live values
        params = 2 * tc * 128 * 4            # (TC, K*K+3) lane-padded, double-buffered
        return io + f32_tmp + params

    fits = [d for d in cands if vmem_bytes(d) <= budget]
    tc = max(fits) if fits else min(cands)
    # TODO(synk): if even the smallest channel tile exceeds the budget (very large H*W),
    # a spatial grid axis with halo handling would be needed.
    while N * (C // tc) < _MIN_GRID_STEPS:
        smaller = [d for d in cands if d < tc]
        if not smaller:
            break
        tc = max(smaller)
    return tc


def residual_convmixer_block(x, w_dw, b, gamma, beta, running_mean, running_var,
                             *, eps=1e-5, approx_gelu=True, channel_block=None):
    """out = BatchNorm(GELU(DepthwiseConv(x))) + x   (Residual-wrapped ConvMixer block).

    x: (N, C, H, W); w_dw: (C, 1, K, K) PyTorch depthwise Conv2d weight;
    b/gamma/beta/running_mean/running_var: (C,).  I/O stays in x.dtype (bf16 supported
    on v6e/v7x), accumulation is f32 in-vreg.  approx_gelu=False gives exact-erf parity
    with PyTorch's default nn.GELU()."""
    N, C, H, W = x.shape
    K = w_dw.shape[-1]
    assert w_dw.shape == (C, 1, K, K)
    # PyTorch padding='same' (stride 1): total pad K-1, left/top gets (K-1)//2.
    pad = (K - 1) // 2
    L = H * W
    KK = K * K
    P = KK + 3

    # Pack taps + conv bias + folded-BN scale/offset into one 2-D per-channel array.
    taps = w_dw[:, 0, :, :].reshape(C, KK).astype(jnp.float32)
    scale = (gamma.astype(jnp.float32) *
             jax.lax.rsqrt(running_var.astype(jnp.float32) + eps))
    offset = beta.astype(jnp.float32) - running_mean.astype(jnp.float32) * scale
    params = jnp.concatenate(
        [taps, b.astype(jnp.float32)[:, None], scale[:, None], offset[:, None]],
        axis=1)                                                     # (C, P)

    vmem_cap = _vmem_capacity_bytes()
    if channel_block is None:
        channel_block = _pick_channel_block(C, N, L, x.dtype.itemsize, vmem_cap // 4)
    TC = int(channel_block)
    if C % TC != 0 or not (TC % 8 == 0 or TC == C):
        raise ValueError(
            f"channel_block={TC} must divide C={C} and be a multiple of 8 (or equal C) "
            "to satisfy the TPU (8,128) block-tiling constraint")

    kernel = functools.partial(_residual_convmixer_kernel,
                               H=H, W=W, K=K, pad=pad, approx_gelu=approx_gelu)

    # Lane-dense blocks: minor dim is H*W.  Grid is (channel-tiles, batch) with batch
    # innermost so the per-channel param block index is unchanged across n and is not
    # re-DMA'd every step.
    x_flat = x.reshape(N, C, L)
    spec_x = pl.BlockSpec((None, TC, L), lambda c, n: (n, c, 0))
    spec_p = pl.BlockSpec((TC, P), lambda c, n: (c, 0))

    out_flat = pl.pallas_call(
        kernel,
        out_shape=jax.ShapeDtypeStruct((N, C, L), x.dtype),
        grid_spec=pltpu.PrefetchScalarGridSpec(
            num_scalar_prefetch=0,
            grid=(C // TC, N),
            in_specs=[spec_x, spec_p],
            out_specs=spec_x,
        ),
        compiler_params=pltpu.CompilerParams(
            dimension_semantics=("parallel", "parallel"),
            vmem_limit_bytes=int(vmem_cap // 2),   # headroom below physical VMEM
        ),
    )(x_flat, params)
    return out_flat.reshape(N, C, H, W)


def _reference(x, w_dw, b, gamma, beta, mean, var, eps=1e-5, approximate=False):
    C = x.shape[1]
    y = jax.lax.conv_general_dilated(
        x, w_dw, window_strides=(1, 1), padding="SAME",
        dimension_numbers=("NCHW", "OIHW", "NCHW"),
        feature_group_count=C)
    y = y + b[None, :, None, None]
    y = jax.nn.gelu(y, approximate=approximate)
    y = (y - mean[None, :, None, None]) / jnp.sqrt(var[None, :, None, None] + eps)
    y = y * gamma[None, :, None, None] + beta[None, :, None, None]
    return y + x


if __name__ == "__main__":
    N, C, H, W, K = 2, 4, 16, 16, 3

    key = jax.random.PRNGKey(0)
    kx, kw, kb, kg, kbe, km, kv = jax.random.split(key, 7)

    x = jax.random.normal(kx, (N, C, H, W), jnp.float32)
    # depthwise Conv2d(dim, dim, K, groups=dim) weight/bias (PyTorch shapes)
    w_dw = jax.random.normal(kw, (C, 1, K, K), jnp.float32) * 0.2
    b = jax.random.normal(kb, (C,), jnp.float32) * 0.1
    # BatchNorm2d(dim) affine params + running stats (inference mode)
    gamma = 1.0 + 0.1 * jax.random.normal(kg, (C,), jnp.float32)
    beta = 0.1 * jax.random.normal(kbe, (C,), jnp.float32)
    running_mean = 0.1 * jax.random.normal(km, (C,), jnp.float32)
    running_var = jax.random.uniform(kv, (C,), jnp.float32, 0.5, 1.5)

    # Exact-erf path: bit-parity with PyTorch's default nn.GELU().
    out_exact = jax.block_until_ready(
        residual_convmixer_block(x, w_dw, b, gamma, beta, running_mean, running_var,
                                 approx_gelu=False))
    ref_exact = _reference(x, w_dw, b, gamma, beta, running_mean, running_var,
                           approximate=False)
    assert out_exact.shape == (N, C, H, W) and out_exact.dtype == jnp.float32
    assert jnp.allclose(out_exact, ref_exact, atol=1e-4, rtol=1e-4), \
        float(jnp.max(jnp.abs(out_exact - ref_exact)))

    # Default fast path: tanh GELU (EUP slot) — checked against the tanh reference.
    out_fast = jax.block_until_ready(
        residual_convmixer_block(x, w_dw, b, gamma, beta, running_mean, running_var))
    ref_fast = _reference(x, w_dw, b, gamma, beta, running_mean, running_var,
                          approximate=True)
    assert jnp.allclose(out_fast, ref_fast, atol=1e-4, rtol=1e-4), \
        float(jnp.max(jnp.abs(out_fast - ref_fast)))

    print("KERNEL_OK")
</pallas_src>

<mosaic_0001>
module attributes {stable_mosaic.version = 11 : i64} {
  func.func @_residual_convmixer_kernel(%arg0: i32, %arg1: i32, %arg2: memref<1x4x256xf32, #tpu.memory_space<vmem>>, %arg3: memref<4x12xf32, #tpu.memory_space<vmem>>, %arg4: memref<1x4x256xf32, #tpu.memory_space<vmem>>) attributes {dimension_semantics = [#tpu.dimension_semantics<parallel>, #tpu.dimension_semantics<parallel>], iteration_bounds = array<i64: 1, 2>, scalar_prefetch = 0 : i64, scratch_operands = 0 : i64, tpu.core_type = #tpu.core_type<tc>, window_params = [{transform_indices = @transform_0, window_bounds = array<i64: 1, 4, 256>}, {transform_indices = @transform_1, window_bounds = array<i64: 4, 12>}, {transform_indices = @transform_2, window_bounds = array<i64: 1, 4, 256>}]} {
    %c0 = arith.constant 0 : index
    %c0_0 = arith.constant 0 : index
    %c0_1 = arith.constant 0 : index
    %0 = vector.load %arg2[%c0, %c0_0, %c0_1] : memref<1x4x256xf32, #tpu.memory_space<vmem>>, vector<1x4x256xf32>
    %1 = vector.shape_cast %0 : vector<1x4x256xf32> to vector<4x256xf32>
    %c0_2 = arith.constant 0 : index
    %c0_3 = arith.constant 0 : index
    %2 = vector.load %arg3[%c0_2, %c0_3] : memref<4x12xf32, #tpu.memory_space<vmem>>, vector<4x12xf32>
    %3 = vector.extract_strided_slice %2 {offsets = [0, 9], sizes = [4, 1], strides = [1, 1]} : vector<4x12xf32> to vector<4x1xf32>
    %4 = vector.extract_strided_slice %2 {offsets = [0, 10], sizes = [4, 1], strides = [1, 1]} : vector<4x12xf32> to vector<4x1xf32>
    %5 = vector.extract_strided_slice %2 {offsets = [0, 11], sizes = [4, 1], strides = [1, 1]} : vector<4x12xf32> to vector<4x1xf32>
    %6 = tpu.iota {dimensions = array<i32: 1>} : vector<1x256xi32>
    %7 = arith.sitofp %6 : vector<1x256xi32> to vector<1x256xf32>
    %cst = arith.constant 5.000000e-01 : f32
    %8 = vector.broadcast %cst : f32 to vector<1x256xf32>
    %9 = arith.addf %7, %8 : vector<1x256xf32>
    %cst_4 = arith.constant 6.250000e-02 : f32
    %10 = vector.broadcast %cst_4 : f32 to vector<1x256xf32>
    %11 = arith.mulf %9, %10 : vector<1x256xf32>
    %12 = math.floor %11 : vector<1x256xf32>
    %cst_5 = arith.constant 1.600000e+01 : f32
    %13 = vector.broadcast %cst_5 : f32 to vector<1x256xf32>
    %14 = arith.mulf %12, %13 : vector<1x256xf32>
    %15 = arith.subf %7, %14 : vector<1x256xf32>
    %cst_6 = arith.constant 0.000000e+00 : f32
    %16 = vector.broadcast %cst_6 : f32 to vector<4x256xf32>
    %17 = vector.extract_strided_slice %2 {offsets = [0, 0], sizes = [4, 1], strides = [1, 1]} : vector<4x12xf32> to vector<4x1xf32>
    %c17_i32 = arith.constant 17 : i32
    %18 = tpu.dynamic_rotate %1 by %c17_i32 dim 1 : vector<4x256xf32>, i32 -> vector<4x256xf32>
    %cst_7 = arith.constant 1.000000e+00 : f32
    %19 = vector.broadcast %cst_7 : f32 to vector<1x256xf32>
    %20 = arith.cmpf oge, %12, %19 : vector<1x256xf32>
    %cst_8 = arith.constant 1.000000e+00 : f32
    %21 = vector.broadcast %cst_8 : f32 to vector<1x256xf32>
    %22 = arith.cmpf oge, %15, %21 : vector<1x256xf32>
    %23 = arith.andi %20, %22 : vector<1x256xi1>
    %cst_9 = arith.constant 0.000000e+00 : f32
    %24 = vector.shape_cast %23 : vector<1x256xi1> to vector<1x256xi1>
    %25 = vector.broadcast %24 : vector<1x256xi1> to vector<4x256xi1>
    %26 = vector.broadcast %cst_9 : f32 to vector<4x256xf32>
    %27 = arith.select %25, %18, %26 : vector<4x256xi1>, vector<4x256xf32>
    %28 = vector.broadcast %17 : vector<4x1xf32> to vector<4x256xf32>
    %29 = arith.mulf %28, %27 : vector<4x256xf32>
    %30 = arith.addf %16, %29 : vector<4x256xf32>
    %31 = vector.extract_strided_slice %2 {offsets = [0, 1], sizes = [4, 1], strides = [1, 1]} : vector<4x12xf32> to vector<4x1xf32>
    %c16_i32 = arith.constant 16 : i32
    %32 = tpu.dynamic_rotate %1 by %c16_i32 dim 1 : vector<4x256xf32>, i32 -> vector<4x256xf32>
    %cst_10 = arith.constant 1.000000e+00 : f32
    %33 = vector.broadcast %cst_10 : f32 to vector<1x256xf32>
    %34 = arith.cmpf oge, %12, %33 : vector<1x256xf32>
    %cst_11 = arith.constant 0.000000e+00 : f32
    %35 = vector.shape_cast %34 : vector<1x256xi1> to vector<1x256xi1>
    %36 = vector.broadcast %35 : vector<1x256xi1> to vector<4x256xi1>
    %37 = vector.broadcast %cst_11 : f32 to vector<4x256xf32>
    %38 = arith.select %36, %32, %37 : vector<4x256xi1>, vector<4x256xf32>
    %39 = vector.broadcast %31 : vector<4x1xf32> to vector<4x256xf32>
    %40 = arith.mulf %39, %38 : vector<4x256xf32>
    %41 = arith.addf %30, %40 : vector<4x256xf32>
    %42 = vector.extract_strided_slice %2 {offsets = [0, 2], sizes = [4, 1], strides = [1, 1]} : vector<4x12xf32> to vector<4x1xf32>
    %c15_i32 = arith.constant 15 : i32
    %43 = tpu.dynamic_rotate %1 by %c15_i32 dim 1 : vector<4x256xf32>, i32 -> vector<4x256xf32>
    %cst_12 = arith.constant 1.000000e+00 : f32
    %44 = vector.broadcast %cst_12 : f32 to vector<1x256xf32>
    %45 = arith.cmpf oge, %12, %44 : vector<1x256xf32>
    %cst_13 = arith.constant 1.500000e+01 : f32
    %46 = vector.broadcast %cst_13 : f32 to vector<1x256xf32>
    %47 = arith.cmpf olt, %15, %46 : vector<1x256xf32>
    %48 = arith.andi %45, %47 : vector<1x256xi1>
    %cst_14 = arith.constant 0.000000e+00 : f32
    %49 = vector.shape_cast %48 : vector<1x256xi1> to vector<1x256xi1>
    %50 = vector.broadcast %49 : vector<1x256xi1> to vector<4x256xi1>
    %51 = vector.broadcast %cst_14 : f32 to vector<4x256xf32>
    %52 = arith.select %50, %43, %51 : vector<4x256xi1>, vector<4x256xf32>
    %53 = vector.broadcast %42 : vector<4x1xf32> to vector<4x256xf32>
    %54 = arith.mulf %53, %52 : vector<4x256xf32>
    %55 = arith.addf %41, %54 : vector<4x256xf32>
    %56 = vector.extract_strided_slice %2 {offsets = [0, 3], sizes = [4, 1], strides = [1, 1]} : vector<4x12xf32> to vector<4x1xf32>
    %c1_i32 = arith.constant 1 : i32
    %57 = tpu.dynamic_rotate %1 by %c1_i32 dim 1 : vector<4x256xf32>, i32 -> vector<4x256xf32>
    %cst_15 = arith.constant 1.000000e+00 : f32
    %58 = vector.broadcast %cst_15 : f32 to vector<1x256xf32>
    %59 = arith.cmpf oge, %15, %58 : vector<1x256xf32>
    %cst_16 = arith.constant 0.000000e+00 : f32
    %60 = vector.shape_cast %59 : vector<1x256xi1> to vector<1x256xi1>
    %61 = vector.broadcast %60 : vector<1x256xi1> to vector<4x256xi1>
    %62 = vector.broadcast %cst_16 : f32 to vector<4x256xf32>
    %63 = arith.select %61, %57, %62 : vector<4x256xi1>, vector<4x256xf32>
    %64 = vector.broadcast %56 : vector<4x1xf32> to vector<4x256xf32>
    %65 = arith.mulf %64, %63 : vector<4x256xf32>
    %66 = arith.addf %55, %65 : vector<4x256xf32>
    %67 = vector.extract_strided_slice %2 {offsets = [0, 4], sizes = [4, 1], strides = [1, 1]} : vector<4x12xf32> to vector<4x1xf32>
    %68 = vector.broadcast %67 : vector<4x1xf32> to vector<4x256xf32>
    %69 = arith.mulf %68, %1 : vector<4x256xf32>
    %70 = arith.addf %66, %69 : vector<4x256xf32>
    %71 = vector.extract_strided_slice %2 {offsets = [0, 5], sizes = [4, 1], strides = [1, 1]} : vector<4x12xf32> to vector<4x1xf32>
    %c255_i32 = arith.constant 255 : i32
    %72 = tpu.dynamic_rotate %1 by %c255_i32 dim 1 : vector<4x256xf32>, i32 -> vector<4x256xf32>
    %cst_17 = arith.constant 1.500000e+01 : f32
    %73 = vector.broadcast %cst_17 : f32 to vector<1x256xf32>
    %74 = arith.cmpf olt, %15, %73 : vector<1x256xf32>
    %cst_18 = arith.constant 0.000000e+00 : f32
    %75 = vector.shape_cast %74 : vector<1x256xi1> to vector<1x256xi1>
    %76 = vector.broadcast %75 : vector<1x256xi1> to vector<4x256xi1>
    %77 = vector.broadcast %cst_18 : f32 to vector<4x256xf32>
    %78 = arith.select %76, %72, %77 : vector<4x256xi1>, vector<4x256xf32>
    %79 = vector.broadcast %71 : vector<4x1xf32> to vector<4x256xf32>
    %80 = arith.mulf %79, %78 : vector<4x256xf32>
    %81 = arith.addf %70, %80 : vector<4x256xf32>
    %82 = vector.extract_strided_slice %2 {offsets = [0, 6], sizes = [4, 1], strides = [1, 1]} : vector<4x12xf32> to vector<4x1xf32>
    %c241_i32 = arith.constant 241 : i32
    %83 = tpu.dynamic_rotate %1 by %c241_i32 dim 1 : vector<4x256xf32>, i32 -> vector<4x256xf32>
    %cst_19 = arith.constant 1.500000e+01 : f32
    %84 = vector.broadcast %cst_19 : f32 to vector<1x256xf32>
    %85 = arith.cmpf olt, %12, %84 : vector<1x256xf32>
    %cst_20 = arith.constant 1.000000e+00 : f32
    %86 = vector.broadcast %cst_20 : f32 to vector<1x256xf32>
    %87 = arith.cmpf oge, %15, %86 : vector<1x256xf32>
    %88 = arith.andi %85, %87 : vector<1x256xi1>
    %cst_21 = arith.constant 0.000000e+00 : f32
    %89 = vector.shape_cast %88 : vector<1x256xi1> to vector<1x256xi1>
    %90 = vector.broadcast %89 : vector<1x256xi1> to vector<4x256xi1>
    %91 = vector.broadcast %cst_21 : f32 to vector<4x256xf32>
    %92 = arith.select %90, %83, %91 : vector<4x256xi1>, vector<4x256xf32>
    %93 = vector.broadcast %82 : vector<4x1xf32> to vector<4x256xf32>
    %94 = arith.mulf %93, %92 : vector<4x256xf32>
    %95 = arith.addf %81, %94 : vector<4x256xf32>
    %96 = vector.extract_strided_slice %2 {offsets = [0, 7], sizes = [4, 1], strides = [1, 1]} : vector<4x12xf32> to vector<4x1xf32>
    %c240_i32 = arith.constant 240 : i32
    %97 = tpu.dynamic_rotate %1 by %c240_i32 dim 1 : vector<4x256xf32>, i32 -> vector<4x256xf32>
    %cst_22 = arith.constant 1.500000e+01 : f32
    %98 = vector.broadcast %cst_22 : f32 to vector<1x256xf32>
    %99 = arith.cmpf olt, %12, %98 : vector<1x256xf32>
    %cst_23 = arith.constant 0.000000e+00 : f32
    %100 = vector.shape_cast %99 : vector<1x256xi1> to vector<1x256xi1>
    %101 = vector.broadcast %100 : vector<1x256xi1> to vector<4x256xi1>
    %102 = vector.broadcast %cst_23 : f32 to vector<4x256xf32>
    %103 = arith.select %101, %97, %102 : vector<4x256xi1>, vector<4x256xf32>
    %104 = vector.broadcast %96 : vector<4x1xf32> to vector<4x256xf32>
    %105 = arith.mulf %104, %103 : vector<4x256xf32>
    %106 = arith.addf %95, %105 : vector<4x256xf32>
    %107 = vector.extract_strided_slice %2 {offsets = [0, 8], sizes = [4, 1], strides = [1, 1]} : vector<4x12xf32> to vector<4x1xf32>
    %c239_i32 = arith.constant 239 : i32
    %108 = tpu.dynamic_rotate %1 by %c239_i32 dim 1 : vector<4x256xf32>, i32 -> vector<4x256xf32>
    %cst_24 = arith.constant 1.500000e+01 : f32
    %109 = vector.broadcast %cst_24 : f32 to vector<1x256xf32>
    %110 = arith.cmpf olt, %12, %109 : vector<1x256xf32>
    %cst_25 = arith.constant 1.500000e+01 : f32
    %111 = vector.broadcast %cst_25 : f32 to vector<1x256xf32>
    %112 = arith.cmpf olt, %15, %111 : vector<1x256xf32>
    %113 = arith.andi %110, %112 : vector<1x256xi1>
    %cst_26 = arith.constant 0.000000e+00 : f32
    %114 = vector.shape_cast %113 : vector<1x256xi1> to vector<1x256xi1>
    %115 = vector.broadcast %114 : vector<1x256xi1> to vector<4x256xi1>
    %116 = vector.broadcast %cst_26 : f32 to vector<4x256xf32>
    %117 = arith.select %115, %108, %116 : vector<4x256xi1>, vector<4x256xf32>
    %118 = vector.broadcast %107 : vector<4x1xf32> to vector<4x256xf32>
    %119 = arith.mulf %118, %117 : vector<4x256xf32>
    %120 = arith.addf %106, %119 : vector<4x256xf32>
    %121 = vector.broadcast %3 : vector<4x1xf32> to vector<4x256xf32>
    %122 = arith.addf %120, %121 : vector<4x256xf32>
    %cst_27 = arith.constant 5.000000e-01 : f32
    %123 = vector.broadcast %cst_27 : f32 to vector<4x256xf32>
    %124 = arith.mulf %123, %122 : vector<4x256xf32>
    %cst_28 = arith.constant 0.707106769 : f32
    %125 = vector.broadcast %cst_28 : f32 to vector<4x256xf32>
    %126 = arith.mulf %122, %125 : vector<4x256xf32>
    %127 = math.erf %126 : vector<4x256xf32>
    %cst_29 = arith.constant 1.000000e+00 : f32
    %128 = vector.broadcast %cst_29 : f32 to vector<4x256xf32>
    %129 = arith.addf %128, %127 : vector<4x256xf32>
    %130 = arith.mulf %124, %129 : vector<4x256xf32>
    %131 = vector.broadcast %4 : vector<4x1xf32> to vector<4x256xf32>
    %132 = arith.mulf %130, %131 : vector<4x256xf32>
    %133 = vector.broadcast %5 : vector<4x1xf32> to vector<4x256xf32>
    %134 = arith.addf %132, %133 : vector<4x256xf32>
    %135 = arith.addf %134, %1 : vector<4x256xf32>
    %c0_30 = arith.constant 0 : index
    %c0_31 = arith.constant 0 : index
    %c0_32 = arith.constant 0 : index
    %136 = vector.load %arg4[%c0_30, %c0_31, %c0_32] : memref<1x4x256xf32, #tpu.memory_space<vmem>>, vector<1x4x256xf32>
    %137 = vector.shape_cast %136 : vector<1x4x256xf32> to vector<4x256xf32>
    %138 = vector.shape_cast %135 : vector<4x256xf32> to vector<1x4x256xf32>
    tpu.vector_store %arg4[%c0_30, %c0_31, %c0_32], %138 {strides = array<i32>} : memref<1x4x256xf32, #tpu.memory_space<vmem>>, vector<1x4x256xf32>,
    return
  }
  func.func @transform_0(%arg0: i32, %arg1: i32) -> (i32, i32, i32) {
    %c0_i32 = arith.constant 0 : i32
    %c0_i32_0 = arith.constant 0 : i32
    return %arg1, %arg0, %c0_i32 : i32, i32, i32
  }
  func.func @transform_1(%arg0: i32, %arg1: i32) -> (i32, i32) {
    %c0_i32 = arith.constant 0 : i32
    %c0_i32_0 = arith.constant 0 : i32
    return %arg0, %c0_i32 : i32, i32
  }
  func.func @transform_2(%arg0: i32, %arg1: i32) -> (i32, i32, i32) {
    %c0_i32 = arith.constant 0 : i32
    %c0_i32_0 = arith.constant 0 : i32
    return %arg1, %arg0, %c0_i32 : i32, i32, i32
  }
}

</mosaic_0001>

<llo_original>
// kernel: tpu_custom_call.1
$region0: #{tpu_custom_call.1}
  #allocation0 [shape = 'u32[]', space=smem, size = 0x4, offset = 0x4, fixed_abs, tag = 'smem constant byte address 0x4 - core index']
  #allocation1 [shape = 'u32[144,128]{1,0:T(1,128)}', space=vmem, size = 0x12000, scoped, tag = 'internal scratch']
  %s0 = inlined_call_operand.hbm [shape: f32[2,4,256], index: 0, kind: input, shape index: {}]
  %s1 = inlined_call_operand.hbm [shape: f32[4,12], index: 1, kind: input, shape index: {}]
  %s2 = inlined_call_operand.hbm [shape: f32[2,4,256], index: 2, kind: output, shape index: {}]
  %s3 = sld [smem:[#allocation0]]
  $region49: #{tpu_custom_call.1} parent=0
    _
  %s5 = ssub.s32 1, %s3
  %s6 = scalar_select 0, %s5, %s3
  $region1: #{tpu_custom_call.1} parent=0
    #allocation2 [shape = 'u8[8192]{0}', space=vmem, size = 0x2000, scoped, tag = 'input window, operand 0']
    #allocation3 [shape = 's32[2]{0}', space=sflag, size = 0x8, scoped, tag = 'scoped memory for tpu_custom_call.1']
    #allocation4 [shape = 's32[2]{0}', space=sflag, size = 0x8, scoped, tag = 'scoped memory for tpu_custom_call.1']
    #allocation5 [shape = 'u8[2048]{0}', space=vmem, size = 0x800, scoped, tag = 'input window, operand 1, single buffered']
    #allocation6 [shape = 's32[1]{0}', space=sflag, size = 0x4, scoped, tag = 'scoped memory for tpu_custom_call.1']
    #allocation7 [shape = 'u8[8192]{0}', space=vmem, size = 0x2000, scoped, tag = 'output window, operand 0']
    %7 = vsyncpa [#allocation3], 0
    %s8 = scalar_lea.sflag [#allocation3], 1
    %9 = vsyncpa %s8, 0
    %10 = vsyncpa [#allocation6], 0
    %11 = vsyncpa [#allocation4], 0
    %s12 = scalar_lea.sflag [#allocation4], 1
    %13 = vsyncpa %s12, 0
    loop: start=0, step=1, limit=4
    $region2: #{tpu_custom_call.1} parent=1 // loop_pre_header
      _
    $region3: #{tpu_custom_call.1} parent=1 // loop_header
      %s15 = sphi 0, %s19
      %p16 = scmp.ge.s32.totalorder %s15, 4
      %s22 = sphi 0, %s34
      %s23 = sphi 0, %s30
      %s24 = sphi 0, %s22
      %s25 = sphi 0, %s23
      %s26 = sphi 0, %s24
      %s27 = sphi 0, %s25
      %s39 = sphi 0, %s41
      %s42 = sphi 0, %s39
      %s43 = sphi 0, %s42
      %s59 = sphi 0, %s43
      %s65 = sphi 0, %s67
      %s68 = sphi 0, %s65
      %s69 = sphi 0, %s68
      %s85 = sphi 0, %s69
      %s93 = sphi 0, %s95
      %s96 = sphi 0, %s93
      %s97 = sphi 0, %s96
      %s113 = sphi 0, %s97
    $region4: #{tpu_custom_call.1} parent=1 // loop_header_branch
      %18 = sbr.rel (%p16) target = $region8
    $region5: #{tpu_custom_call.1} parent=1 // loop_body
      %s20 = ssub.s32 %s15, 1
      %s21 = ssub.s32 %s15, 2
      %s28 = sadd.s32 1, %s23
      %p29 = scmp.ge.s32.totalorder %s28, 2
      %s30 = scalar_select %p29, 0, %s28
      %s31 = sadd.s32 1, %s22
      %s32 = scalar_select %p29, %s31, %s22
      %p33 = scmp.ge.s32.totalorder %s32, 1
      %s34 = scalar_select %p33, 0, %s32
      %s35 = ssub.s32 %s23, %s30
      %s36 = ssub.s32 %s22, %s34
      %s37 = sor.u32 %s35, %s36
      %p38 = scmp.eq.s32.totalorder %s37, 0
      %s40 = sadd.s32 %s39, 1
      %s41 = scalar_select %p38, %s39, %s40
      %p44 = pneg %p38
      %p45 = scmp.eq.s32.totalorder %s15, 1
      %p46 = por %p44, %p45
      %p47 = scmp.ne.s32.totalorder %s39, %s42
      %p48 = scmp.eq.s32.totalorder %s15, 0
      %p49 = por %p47, %p48
      %p50 = scmp.ne.s32.totalorder %s39, %s42
      %p51 = scmp.eq.s32.totalorder %s20, 1
      %p52 = por %p50, %p51
      %p53 = scmp.ne.s32.totalorder %s42, %s43
      %p54 = scmp.eq.s32.totalorder %s20, 0
      %p55 = por %p53, %p54
      %p56 = scmp.ne.s32.totalorder %s42, %s43
      %p57 = scmp.eq.s32.totalorder %s21, 1
      %p58 = por %p56, %p57
      %p60 = scmp.ne.s32.totalorder %s43, %s59
      %p61 = scmp.eq.s32.totalorder %s21, 0
      %p62 = por %p60, %p61
      %s63 = ssub.s32 %s22, %s34
      %p64 = scmp.eq.s32.totalorder %s63, 0
      %s66 = sadd.s32 %s65, 1
      %s67 = scalar_select %p64, %s65, %s66
      %p70 = pneg %p64
      %p71 = scmp.eq.s32.totalorder %s15, 1
      %p72 = por %p70, %p71
      %p73 = scmp.ne.s32.totalorder %s65, %s68
      %p74 = scmp.eq.s32.totalorder %s15, 0
      %p75 = por %p73, %p74
      %p76 = scmp.ne.s32.totalorder %s65, %s68
      %p77 = scmp.eq.s32.totalorder %s20, 1
      %p78 = por %p76, %p77
      %p79 = scmp.ne.s32.totalorder %s68, %s69
      %p80 = scmp.eq.s32.totalorder %s20, 0
      %p81 = por %p79, %p80
      %p82 = scmp.ne.s32.totalorder %s68, %s69
      %p83 = scmp.eq.s32.totalorder %s21, 1
      %p84 = por %p82, %p83
      %p86 = scmp.ne.s32.totalorder %s69, %s85
      %p87 = scmp.eq.s32.totalorder %s21, 0
      %p88 = por %p86, %p87
      %s89 = ssub.s32 %s23, %s30
      %s90 = ssub.s32 %s22, %s34
      %s91 = sor.u32 %s89, %s90
      %p92 = scmp.eq.s32.totalorder %s91, 0
      %s94 = sadd.s32 %s93, 1
      %s95 = scalar_select %p92, %s93, %s94
      %p98 = pneg %p92
      %p99 = scmp.eq.s32.totalorder %s15, 1
      %p100 = por %p98, %p99
      %p101 = scmp.ne.s32.totalorder %s93, %s96
      %p102 = scmp.eq.s32.totalorder %s15, 0
      %p103 = por %p101, %p102
      %p104 = scmp.ne.s32.totalorder %s93, %s96
      %p105 = scmp.eq.s32.totalorder %s20, 1
      %p106 = por %p104, %p105
      %p107 = scmp.ne.s32.totalorder %s96, %s97
      %p108 = scmp.eq.s32.totalorder %s20, 0
      %p109 = por %p107, %p108
      %p110 = scmp.ne.s32.totalorder %s96, %s97
      %p111 = scmp.eq.s32.totalorder %s21, 1
      %p112 = por %p110, %p111
      %p114 = scmp.ne.s32.totalorder %s97, %s113
      %p115 = scmp.eq.s32.totalorder %s21, 0
      %p116 = por %p114, %p115
      %p117 = scmp.le.s32.totalorder 1, %s15
      %p118 = scmp.lt.s32.totalorder %s15, 3
      %p119 = pnand %p117, %p118
      %p120 = pneg %p119
      // Predicated region
      $region9: #{tpu_custom_call.1} parent=5 // pred_check
        _
      $region10: #{tpu_custom_call.1} parent=5 // pred_check_branch
        %122 = sbr.rel (%p119) target = $region12
      $region11: #{tpu_custom_call.1} parent=5 // pred_region
        %s123 = ssub.s32 %s15, 1
        // Predicated region
        $region13: #{tpu_custom_call.1} parent=11 // pred_check
          %p124 = pneg %p81
        $region14: #{tpu_custom_call.1} parent=11 // pred_check_branch
          %126 = sbr.rel (%p124) target = $region16
        $region15: #{tpu_custom_call.1} parent=11 // pred_region
          %s128 = ssub.s32 64, 64
          %129 = vsyncadd [#allocation6], %s128
          %s130 = smul.addr %s24, 64
          %s131 = scalar_lea.hbm %s1, %s130
          %s133 = sshll.u32 [#allocation5], 4
          %s134 = int_to_ptr.vmem [resolvable:$true] %s133
          %136 = dma.hbm_to_vmem [thread:$0]  %s131, 64, %s134, [#allocation6]
        $region16: #{tpu_custom_call.1} parent=11 // pred_fallthru
          _
      $region12: #{tpu_custom_call.1} parent=5 // pred_fallthru
        _
      %p137 = scmp.lt.s32.totalorder %s15, 2
      // Predicated region
      $region17: #{tpu_custom_call.1} parent=5 // pred_check
        %p138 = pneg %p137
      $region18: #{tpu_custom_call.1} parent=5 // pred_check_branch
        %140 = sbr.rel (%p138) target = $region20
      $region19: #{tpu_custom_call.1} parent=5 // pred_region
        // Predicated region
        $region21: #{tpu_custom_call.1} parent=19 // pred_check
          %p141 = pneg %p49
        $region22: #{tpu_custom_call.1} parent=19 // pred_check_branch
          %143 = sbr.rel (%p141) target = $region24
        $region23: #{tpu_custom_call.1} parent=19 // pred_region
          %s144 = sand.u32 %s39, 1
          %s145 = scalar_lea.sflag [#allocation3], %s144
          %s146 = sand.u32 %s39, 1
          %s147 = smul.addr %s146, 8
          %s148 = scalar_lea.vmem [#allocation2], %s147
          %s150 = ssub.s32 128, 128
          %151 = vsyncadd %s145, %s150
          %s152 = smul.addr %s22, 2
          %s153 = smul.addr %s23, 2
          %s154 = sadd.s32 %s152, %s153
          %s155 = smul.addr %s154, 64
          %s156 = scalar_lea.hbm %s0, %s155
          %s158 = sshll.u32 %s148, 4
          %s159 = int_to_ptr.vmem [resolvable:$true] %s158
          %161 = dma.hbm_to_vmem [thread:$0]  %s156, 128, %s159, %s145
        $region24: #{tpu_custom_call.1} parent=19 // pred_fallthru
          _
      $region20: #{tpu_custom_call.1} parent=5 // pred_fallthru
        _
      %p162 = scmp.le.s32.totalorder 1, %s15
      %p163 = scmp.lt.s32.totalorder %s15, 3
      %p164 = pnand %p162, %p163
      %p165 = pneg %p164
      // Predicated region
      $region25: #{tpu_custom_call.1} parent=5 // pred_check
        _
      $region26: #{tpu_custom_call.1} parent=5 // pred_check_branch
        %167 = sbr.rel (%p164) target = $region28
      $region27: #{tpu_custom_call.1} parent=5 // pred_region
        %s168 = ssub.s32 %s15, 1
        %s169 = sand.u32 %s42, 1
        %s170 = scalar_lea.sflag [#allocation3], %s169
        %s171 = sand.u32 %s42, 1
        %s172 = smul.addr %s171, 8
        %s173 = scalar_lea.vmem [#allocation2], %s172
        // Predicated region
        $region29: #{tpu_custom_call.1} parent=27 // pred_check
          %p174 = pneg %p55
        $region30: #{tpu_custom_call.1} parent=27 // pred_check_branch
          %176 = sbr.rel (%p174) target = $region32
        $region31: #{tpu_custom_call.1} parent=27 // pred_region
          %177 = dma.done %s170, 128
        $region32: #{tpu_custom_call.1} parent=27 // pred_fallthru
          _
        // Predicated region
        $region33: #{tpu_custom_call.1} parent=27 // pred_check
          %p178 = pneg %p81
        $region34: #{tpu_custom_call.1} parent=27 // pred_check_branch
          %180 = sbr.rel (%p178) target = $region36
        $region35: #{tpu_custom_call.1} parent=27 // pred_region
          %181 = dma.done [#allocation6], 64
        $region36: #{tpu_custom_call.1} parent=27 // pred_fallthru
          _
        %s182 = sand.u32 %s42, 1
        %s183 = scalar_lea.sflag [#allocation3], %s182
        %s184 = sand.u32 %s42, 1
        %s185 = smul.addr %s184, 8
        %s186 = scalar_lea.vmem [#allocation2], %s185
        %p187 = pneg %p55
        %p188 = pneg %p52
        %p189 = pneg %p81
        %p190 = pneg %p78
        %p191 = pneg %p109
        %p192 = pneg %p106
        %s193 = sand.u32 %s96, 1
        %s194 = scalar_lea.sflag [#allocation4], %s193
        %s195 = sand.u32 %s96, 1
        %s196 = smul.addr %s195, 8
        %s197 = scalar_lea.vmem [#allocation7], %s196
        %v198 = vld [vmem:[%s173] sm:$0xff]
        %v199 = vld [vmem:[#allocation5] sm:$0xf]
        %v200 = vlaneseq
        %v201 = vand.u32 %v200, 127
        %v202 = vadd.s32 %v201, 128
        %v203 = vcvt.s32.f32 %v201
        %v204 = vcvt.s32.f32 %v202
        %v205 = vadd.f32 %v203, 0.5
        %v206 = vadd.f32 %v204, 0.5
        %v207 = vmul.f32 %v205, 0.0625
        %v208 = vmul.f32 %v206, 0.0625
        %v209 = vfloor.f32 %v207
        %v210 = vfloor.f32 %v208
        %v211 = vmul.f32 %v209, 16.0
        %v212 = vmul.f32 %v210, 16.0
        %v213 = vsub.f32 %v203, %v211
        %v214 = vsub.f32 %v204, %v212
        %v216 = vcombine.high %v198, %v198
        %218 = vrot.lane.b32.xlu0 %v198, 17
        %v219 = vpop.permute.xlu0 %218
        %220 = vrot.lane.b32.xlu0 %v216, 17
        %v221 = vpop.permute.xlu0 %220
        %vm222 = vcmp.lt.s32.totalorder %v201, 17
        %v223 = vsel %vm222, %v219, %v221
        %v224 = vsel %vm222, %v221, %v219
        %vm225 = vcmp.ge.f32.partialorder %v209, 1.0
        %vm226 = vcmp.ge.f32.partialorder %v210, 1.0
        %vm227 = vcmp.ge.f32.partialorder %v213, 1.0
        %vm228 = vcmp.ge.f32.partialorder %v214, 1.0
        %vm229 = vmand %vm225, %vm227
        %vm230 = vmand %vm226, %vm228
        %v231 = vsel %vm229, 1, 0
        %v232 = vsel %vm230, 1, 0
        %vm233 = vcmp.eq.s32.totalorder %v231, 1
        %vm234 = vcmp.eq.s32.totalorder %v232, 1
        %v235 = vsel %vm233, %v224, 0.0
        %v236 = vsel %vm234, %v223, 0.0
        %238 = vset.pattern.permute.xlu0 0
        %239 = vperm.xlu0 %238, %v199
        %v240 = vpop.permute.xlu0 %239
        %v242 = vmul.f32 %v240, %v235
        %v243 = vmul.f32 %v240, %v236
        %v244 = vadd.f32 %v242, 0.0
        %v245 = vadd.f32 %v243, 0.0
        %246 = vrot.lane.b32.xlu0 %v198, 16
        %v247 = vpop.permute.xlu0 %246
        %248 = vrot.lane.b32.xlu0 %v216, 16
        %v249 = vpop.permute.xlu0 %248
        %vm250 = vcmp.lt.s32.totalorder %v201, 16
        %v251 = vsel %vm250, %v247, %v249
        %v252 = vsel %vm250, %v249, %v247
        %v253 = vsel %vm225, 1, 0
        %v254 = vsel %vm226, 1, 0
        %vm255 = vcmp.eq.s32.totalorder %v253, 1
        %vm256 = vcmp.eq.s32.totalorder %v254, 1
        %v257 = vsel %vm255, %v252, 0.0
        %v258 = vsel %vm256, %v251, 0.0
        %259 = vset.pattern.permute.xlu0 1
        %260 = vperm.xlu0 %259, %v199
        %v261 = vpop.permute.xlu0 %260
        %v263 = vmul.f32 %v261, %v257
        %v264 = vmul.f32 %v261, %v258
        %v265 = vadd.f32 %v244, %v263
        %v266 = vadd.f32 %v245, %v264
        %267 = vrot.lane.b32.xlu0 %v198, 15
        %v268 = vpop.permute.xlu0 %267
        %269 = vrot.lane.b32.xlu0 %v216, 15
        %v270 = vpop.permute.xlu0 %269
        %vm271 = vcmp.lt.s32.totalorder %v201, 15
        %v272 = vsel %vm271, %v268, %v270
        %v273 = vsel %vm271, %v270, %v268
        %vm274 = vcmp.lt.f32.partialorder %v213, 15.0
        %vm275 = vcmp.lt.f32.partialorder %v214, 15.0
        %vm276 = vmand %vm225, %vm274
        %vm277 = vmand %vm226, %vm275
        %v278 = vsel %vm276, 1, 0
        %v279 = vsel %vm277, 1, 0
        %vm280 = vcmp.eq.s32.totalorder %v278, 1
        %vm281 = vcmp.eq.s32.totalorder %v279, 1
        %v282 = vsel %vm280, %v273, 0.0
        %v283 = vsel %vm281, %v272, 0.0
        %284 = vset.pattern.permute.xlu0 2
        %285 = vperm.xlu0 %284, %v199
        %v286 = vpop.permute.xlu0 %285
        %v288 = vmul.f32 %v286, %v282
        %v289 = vmul.f32 %v286, %v283
        %v290 = vadd.f32 %v265, %v288
        %v291 = vadd.f32 %v266, %v289
        %292 = vrot.lane.b32.xlu0 %v198, 1
        %v293 = vpop.permute.xlu0 %292
        %294 = vrot.lane.b32.xlu0 %v216, 1
        %v295 = vpop.permute.xlu0 %294
        %vm296 = vcmp.lt.s32.totalorder %v201, 1
        %v297 = vsel %vm296, %v293, %v295
        %v298 = vsel %vm296, %v295, %v293
        %v299 = vsel %vm227, 1, 0
        %v300 = vsel %vm228, 1, 0
        %vm301 = vcmp.eq.s32.totalorder %v299, 1
        %vm302 = vcmp.eq.s32.totalorder %v300, 1
        %v303 = vsel %vm301, %v298, 0.0
        %v304 = vsel %vm302, %v297, 0.0
        %305 = vset.pattern.permute.xlu0 3
        %306 = vperm.xlu0 %305, %v199
        %v307 = vpop.permute.xlu0 %306
        %v309 = vmul.f32 %v307, %v303
        %v310 = vmul.f32 %v307, %v304
        %v311 = vadd.f32 %v290, %v309
        %v312 = vadd.f32 %v291, %v310
        %313 = vset.pattern.permute.xlu0 4
        %314 = vperm.xlu0 %313, %v199
        %v315 = vpop.permute.xlu0 %314
        %v317 = vmul.f32 %v315, %v198
        %v318 = vmul.f32 %v315, %v216
        %v319 = vadd.f32 %v311, %v317
        %v320 = vadd.f32 %v312, %v318
        %321 = vrot.lane.b32.xlu0 %v198, 127
        %v322 = vpop.permute.xlu0 %321
        %323 = vrot.lane.b32.xlu0 %v216, 127
        %v324 = vpop.permute.xlu0 %323
        %vm325 = vcmp.lt.s32.totalorder %v201, 127
        %v326 = vsel %vm325, %v322, %v324
        %v327 = vsel %vm325, %v324, %v322
        %v328 = vsel %vm274, 1, 0
        %v329 = vsel %vm275, 1, 0
        %vm330 = vcmp.eq.s32.totalorder %v328, 1
        %vm331 = vcmp.eq.s32.totalorder %v329, 1
        %v332 = vsel %vm330, %v326, 0.0
        %v333 = vsel %vm331, %v327, 0.0
        %334 = vset.pattern.permute.xlu0 5
        %335 = vperm.xlu0 %334, %v199
        %v336 = vpop.permute.xlu0 %335
        %v338 = vmul.f32 %v336, %v332
        %v339 = vmul.f32 %v336, %v333
        %v340 = vadd.f32 %v319, %v338
        %v341 = vadd.f32 %v320, %v339
        %342 = vrot.lane.b32.xlu0 %v198, 113
        %v343 = vpop.permute.xlu0 %342
        %344 = vrot.lane.b32.xlu0 %v216, 113
        %v345 = vpop.permute.xlu0 %344
        %vm346 = vcmp.lt.s32.totalorder %v201, 113
        %v347 = vsel %vm346, %v343, %v345
        %v348 = vsel %vm346, %v345, %v343
        %vm349 = vcmp.lt.f32.partialorder %v209, 15.0
        %vm350 = vcmp.lt.f32.partialorder %v210, 15.0
        %vm351 = vmand %vm349, %vm227
        %vm352 = vmand %vm350, %vm228
        %v353 = vsel %vm351, 1, 0
        %v354 = vsel %vm352, 1, 0
        %vm355 = vcmp.eq.s32.totalorder %v353, 1
        %vm356 = vcmp.eq.s32.totalorder %v354, 1
        %v357 = vsel %vm355, %v347, 0.0
        %v358 = vsel %vm356, %v348, 0.0
        %359 = vset.pattern.permute.xlu0 6
        %360 = vperm.xlu0 %359, %v199
        %v361 = vpop.permute.xlu0 %360
        %v363 = vmul.f32 %v361, %v357
        %v364 = vmul.f32 %v361, %v358
        %v365 = vadd.f32 %v340, %v363
        %v366 = vadd.f32 %v341, %v364
        %367 = vrot.lane.b32.xlu0 %v198, 112
        %v368 = vpop.permute.xlu0 %367
        %369 = vrot.lane.b32.xlu0 %v216, 112
        %v370 = vpop.permute.xlu0 %369
        %vm371 = vcmp.lt.s32.totalorder %v201, 112
        %v372 = vsel %vm371, %v368, %v370
        %v373 = vsel %vm371, %v370, %v368
        %v374 = vsel %vm349, 1, 0
        %v375 = vsel %vm350, 1, 0
        %vm376 = vcmp.eq.s32.totalorder %v374, 1
        %vm377 = vcmp.eq.s32.totalorder %v375, 1
        %v378 = vsel %vm376, %v372, 0.0
        %v379 = vsel %vm377, %v373, 0.0
        %380 = vset.pattern.permute.xlu0 7
        %381 = vperm.xlu0 %380, %v199
        %v382 = vpop.permute.xlu0 %381
        %v384 = vmul.f32 %v382, %v378
        %v385 = vmul.f32 %v382, %v379
        %v386 = vadd.f32 %v365, %v384
        %v387 = vadd.f32 %v366, %v385
        %388 = vrot.lane.b32.xlu0 %v198, 111
        %v389 = vpop.permute.xlu0 %388
        %390 = vrot.lane.b32.xlu0 %v216, 111
        %v391 = vpop.permute.xlu0 %390
        %vm392 = vcmp.lt.s32.totalorder %v201, 111
        %v393 = vsel %vm392, %v389, %v391
        %v394 = vsel %vm392, %v391, %v389
        %vm395 = vmand %vm349, %vm274
        %vm396 = vmand %vm350, %vm275
        %v397 = vsel %vm395, 1, 0
        %v398 = vsel %vm396, 1, 0
        %vm399 = vcmp.eq.s32.totalorder %v397, 1
        %vm400 = vcmp.eq.s32.totalorder %v398, 1
        %v401 = vsel %vm399, %v393, 0.0
        %v402 = vsel %vm400, %v394, 0.0
        %403 = vset.pattern.permute.xlu0 8
        %404 = vperm.xlu0 %403, %v199
        %v405 = vpop.permute.xlu0 %404
        %v407 = vmul.f32 %v405, %v401
        %v408 = vmul.f32 %v405, %v402
        %v409 = vadd.f32 %v386, %v407
        %v410 = vadd.f32 %v387, %v408
        %411 = vset.pattern.permute.xlu0 9
        %412 = vperm.xlu0 %411, %v199
        %v413 = vpop.permute.xlu0 %412
        %v415 = vadd.f32 %v409, %v413
        %v416 = vadd.f32 %v410, %v413
        %v417 = vmul.f32 %v415, 0.5
        %v418 = vmul.f32 %v416, 0.5
        %v419 = vmul.f32 %v415, 0.70710677
        %v420 = vmul.f32 %v416, 0.70710677
        %v421 = verf.f32.pop %v419
        %v422 = verf.f32.pop %v420
        %v423 = vadd.f32 %v421, 1.0
        %v424 = vadd.f32 %v422, 1.0
        %v425 = vmul.f32 %v417, %v423
        %v426 = vmul.f32 %v418, %v424
        %427 = vset.pattern.permute.xlu0 10
        %428 = vperm.xlu0 %427, %v199
        %v429 = vpop.permute.xlu0 %428
        %v431 = vmul.f32 %v425, %v429
        %v432 = vmul.f32 %v426, %v429
        %433 = vset.pattern.permute.xlu0 11
        %434 = vperm.xlu0 %433, %v199
        %v435 = vpop.permute.xlu0 %434
        %v437 = vadd.f32 %v431, %v435
        %v438 = vadd.f32 %v432, %v435
        %v439 = vadd.f32 %v437, %v198
        %v440 = vadd.f32 %v438, %v216
        %v443 = vcombine.low %v439, %v440
        %445 = vst [vmem:[%s197] sm:$0xff] %v443
        %s446 = sand.u32 %s96, 1
        %s447 = scalar_lea.sflag [#allocation4], %s446
        %s448 = sand.u32 %s96, 1
        %s449 = smul.addr %s448, 8
        %s450 = scalar_lea.vmem [#allocation7], %s449
        // Predicated region
        $region37: #{tpu_custom_call.1} parent=27 // pred_check
          %p451 = pneg %p106
        $region38: #{tpu_custom_call.1} parent=27 // pred_check_branch
          %453 = sbr.rel (%p451) target = $region40
        $region39: #{tpu_custom_call.1} parent=27 // pred_region
          %s455 = ssub.s32 128, 128
          %456 = vsyncadd %s447, %s455
          %s457 = smul.addr %s24, 2
          %s458 = smul.addr %s25, 2
          %s459 = sadd.s32 %s457, %s458
          %s460 = smul.addr %s459, 64
          %s461 = scalar_lea.hbm %s2, %s460
          %s463 = sshll.u32 %s450, 4
          %s464 = int_to_ptr.vmem [resolvable:$true] %s463
          %466 = dma.vmem_to_hbm [thread:$0]  %s464, 128, %s461, %s447
        $region40: #{tpu_custom_call.1} parent=27 // pred_fallthru
          _
      $region28: #{tpu_custom_call.1} parent=5 // pred_fallthru
        _
      %p467 = scmp.le.s32.totalorder 2, %s15
      // Predicated region
      $region41: #{tpu_custom_call.1} parent=5 // pred_check
        %p468 = pneg %p467
      $region42: #{tpu_custom_call.1} parent=5 // pred_check_branch
        %470 = sbr.rel (%p468) target = $region44
      $region43: #{tpu_custom_call.1} parent=5 // pred_region
        %s471 = ssub.s32 %s15, 2
        // Predicated region
        $region45: #{tpu_custom_call.1} parent=43 // pred_check
          %p472 = pneg %p112
        $region46: #{tpu_custom_call.1} parent=43 // pred_check_branch
          %474 = sbr.rel (%p472) target = $region48
        $region47: #{tpu_custom_call.1} parent=43 // pred_region
          %s475 = sand.u32 %s97, 1
          %s476 = scalar_lea.sflag [#allocation4], %s475
          %s477 = sand.u32 %s97, 1
          %s478 = smul.addr %s477, 8
          %s479 = scalar_lea.vmem [#allocation7], %s478
          %480 = dma.done %s476, 128
        $region48: #{tpu_custom_call.1} parent=43 // pred_fallthru
          _
      $region44: #{tpu_custom_call.1} parent=5 // pred_fallthru
        _
    $region6: #{tpu_custom_call.1} parent=1 // loop_footer
      %s19 = sadd.s32 1, %s15
    $region7: #{tpu_custom_call.1} parent=1 // loop_footer_branch
      %14 = sbr.rel target = $region3
    $region8: #{tpu_custom_call.1} parent=1 // loop_exit
      _
    %481 = vsyncpa [#allocation3], 1
    %s482 = scalar_lea.sflag [#allocation3], 1
    %483 = vsyncpa %s482, 1
    %484 = vsyncpa [#allocation6], 1
    %485 = vsyncpa [#allocation4], 1
    %s486 = scalar_lea.sflag [#allocation4], 1
    %487 = vsyncpa %s486, 1

</llo_original>
